<compile_context>
chip_gen: v5e
topology: v5e:2x2
jax: 0.10.0
libtpu: 0.0.40
codegen_flags: <defaults>
</compile_context>

<pallas_src>
import jax
import jax.numpy as jnp
import numpy as np
from jax.experimental import pallas as pl
from jax.experimental.pallas import tpu as pltpu


def _se_kernel(x_ref, w1t_ref, w2_ref, o_ref):
    # x_ref : (C, S) activation slab for one batch element (S = H*W*D, lane axis)
    # w1t_ref: (C, Cr) = W1.T   (first Linear, bias=False), float32
    # w2_ref : (C, Cr) = W2     (second Linear, bias=False), float32
    C, S = x_ref.shape
    inv_s = jnp.float32(1.0 / S)

    # Pass 1: global average pool over all spatial positions (lane reduction),
    # accumulated in float32 regardless of the activation dtype.
    pooled = jnp.sum(x_ref[...].astype(jnp.float32), axis=-1,
                     keepdims=True) * inv_s                      # (C, 1)

    # Tiny 2-layer MLP on VPU/XLU (far below MXU tile size; keep off the MXU).
    # h[j] = relu(sum_c pooled[c] * W1[j, c])
    h = jnp.maximum(
        jnp.sum(w1t_ref[...] * pooled, axis=0, keepdims=True), 0.0)   # (1, Cr)
    # scale[c] = sigmoid(sum_j h[j] * W2[c, j])
    scale = jax.nn.sigmoid(
        jnp.sum(w2_ref[...] * h, axis=1, keepdims=True))              # (C, 1)
    # TODO(synk): if C grows to 256+, express both reductions along the lane
    # axis (cheaper XLU path); at C <= 64 this is noise.

    # Pass 2: stream the slab again from the resident VMEM buffer and store
    # the rescaled output (lane-dense, unmasked vst).
    o_ref[...] = (x_ref[...].astype(jnp.float32) * scale).astype(o_ref.dtype)


def squeeze_excitation_pallas_flat(x3, w1, w2):
    """SE on a lane-dense activation. x3: (B, C, S); w1: (Cr, C); w2: (C, Cr)."""
    B, C, S = x3.shape
    Cr = w1.shape[0]
    itemsize = jnp.dtype(x3.dtype).itemsize

    w1t = jnp.transpose(w1, (1, 0)).astype(jnp.float32)   # (C, Cr), one-time
    w2f = w2.astype(jnp.float32)                          # (C, Cr)

    # VMEM budget: input + output slabs, each double-buffered by the pipeline.
    slab_bytes = C * S * itemsize
    needed = 4 * slab_bytes + 4 * C * Cr * 4 + (2 << 20)  # + weights + slack
    # TODO(synk): if `needed` exceeds ~48 MiB (v7x has only 64 MiB VMEM/TC,
    # half of v5e/v6e), switch to a two-pass S-tiled grid
    # (grid=(B, S//tS): pool-accumulate pass, then rescale pass) instead of
    # the single-slab-per-batch design below.
    vmem_limit = int(min(max(needed, 16 << 20), 100 << 20))

    cost = pl.CostEstimate(
        flops=2 * B * C * S + 4 * B * C * Cr,      # pool adds + rescale muls + MLP
        transcendentals=B * C,                      # sigmoid
        bytes_accessed=2 * B * C * S * itemsize + 2 * C * Cr * 4,
    )

    out = pl.pallas_call(
        _se_kernel,
        out_shape=jax.ShapeDtypeStruct((B, C, S), x3.dtype),
        grid_spec=pltpu.PrefetchScalarGridSpec(
            num_scalar_prefetch=0,
            grid=(B,),
            in_specs=[
                pl.BlockSpec((None, C, S), lambda b: (b, 0, 0)),  # x slab
                pl.BlockSpec((C, Cr), lambda b: (0, 0)),          # W1.T (full)
                pl.BlockSpec((C, Cr), lambda b: (0, 0)),          # W2   (full)
            ],
            out_specs=pl.BlockSpec((None, C, S), lambda b: (b, 0, 0)),
        ),
        compiler_params=pltpu.CompilerParams(
            dimension_semantics=("parallel",),
            vmem_limit_bytes=vmem_limit),
        input_output_aliases={0: 0},   # SE is an in-place rescale of x
        cost_estimate=cost,
    )(x3, w1t, w2f)
    # TODO(synk): B=1 serving on v7x leaves one TensorCore idle; if that is a
    # real shape, split S across cores (share partial pools via CMEM +
    # core_barrier) so both cores do the dominant rescale/store phase.
    return out


def squeeze_excitation_pallas(x, w1, w2):
    """x: (B, C, H, W, D) activation. Matches the PyTorch module's forward.

    NOTE: the (B,C,H,W,D) <-> (B,C,H*W*D) reshapes change the physical (8,128)
    tiled layout whenever D < 128, so XLA inserts relayout copies around the
    kernel. In a full model, keep the activation in a lane-dense (B, C, S)
    layout across layers and call `squeeze_excitation_pallas_flat` directly —
    that relayout traffic, not the kernel, is the dominant cost at such shapes.
    """
    B, C, H, W, D = x.shape
    y = squeeze_excitation_pallas_flat(x.reshape(B, C, H * W * D), w1, w2)
    return y.reshape(B, C, H, W, D)


def se_reference(x, w1, w2):
    """Pure-JAX reference mirroring the PyTorch module."""
    pooled = jnp.mean(x, axis=(2, 3, 4))                  # (B, C)
    h = jnp.maximum(pooled @ w1.T, 0.0)                   # (B, Cr)
    s = jax.nn.sigmoid(h @ w2.T)                          # (B, C)
    return x * s[:, :, None, None, None]


if __name__ == "__main__":
    key = jax.random.PRNGKey(0)

    # Squeeze_Excitation(channel=32, r=8):
    #   Linear(32 -> 4) -> ReLU -> Linear(4 -> 32) -> Sigmoid
    B, C, H, W, D = 2, 32, 16, 16, 16
    r = 8
    Cr = C // r

    k_x, k_w1, k_w2 = jax.random.split(key, 3)
    x = jax.random.normal(k_x, (B, C, H, W, D), jnp.float32)
    w1 = jax.random.normal(k_w1, (Cr, C), jnp.float32) / jnp.sqrt(float(C))
    w2 = jax.random.normal(k_w2, (C, Cr), jnp.float32) / jnp.sqrt(float(Cr))

    fwd = jax.jit(squeeze_excitation_pallas)
    out = jax.block_until_ready(fwd(x, w1, w2))

    ref = se_reference(x, w1, w2)
    np.testing.assert_allclose(np.asarray(out), np.asarray(ref),
                               rtol=1e-5, atol=1e-5)
    assert out.shape == (B, C, H, W, D)
    print("KERNEL_OK")
</pallas_src>

<mosaic_0001>
module attributes {stable_mosaic.version = 11 : i64} {
  func.func @_se_kernel(%arg0: i32, %arg1: memref<1x32x4096xf32, #tpu.memory_space<vmem>>, %arg2: memref<32x4xf32, #tpu.memory_space<vmem>>, %arg3: memref<32x4xf32, #tpu.memory_space<vmem>>, %arg4: memref<1x32x4096xf32, #tpu.memory_space<vmem>>) attributes {dimension_semantics = [#tpu.dimension_semantics<parallel>], iteration_bounds = array<i64: 2>, scalar_prefetch = 0 : i64, scratch_operands = 0 : i64, tpu.core_type = #tpu.core_type<tc>, window_params = [{transform_indices = @transform_0, window_bounds = array<i64: 1, 32, 4096>}, {pipeline_mode = #tpu.pipeline_mode<synchronous>, transform_indices = @transform_1, window_bounds = array<i64: 32, 4>}, {pipeline_mode = #tpu.pipeline_mode<synchronous>, transform_indices = @transform_2, window_bounds = array<i64: 32, 4>}, {transform_indices = @transform_3, window_bounds = array<i64: 1, 32, 4096>}]} {
    %c0 = arith.constant 0 : index
    %c0_0 = arith.constant 0 : index
    %c0_1 = arith.constant 0 : index
    %0 = vector.load %arg1[%c0, %c0_0, %c0_1] : memref<1x32x4096xf32, #tpu.memory_space<vmem>>, vector<1x32x4096xf32>
    %1 = vector.shape_cast %0 : vector<1x32x4096xf32> to vector<32x4096xf32>
    %cst = arith.constant dense<0.000000e+00> : vector<32xf32>
    %2 = vector.multi_reduction <add>, %1, %cst [1] : vector<32x4096xf32> to vector<32xf32>
    %3 = vector.shape_cast %2 : vector<32xf32> to vector<32x1xf32>
    %cst_2 = arith.constant 2.44140625E-4 : f32
    %4 = vector.broadcast %cst_2 : f32 to vector<32x1xf32>
    %5 = arith.mulf %3, %4 : vector<32x1xf32>
    %c0_3 = arith.constant 0 : index
    %c0_4 = arith.constant 0 : index
    %6 = vector.load %arg2[%c0_3, %c0_4] : memref<32x4xf32, #tpu.memory_space<vmem>>, vector<32x4xf32>
    %7 = vector.broadcast %5 : vector<32x1xf32> to vector<32x4xf32>
    %8 = arith.mulf %6, %7 : vector<32x4xf32>
    %cst_5 = arith.constant dense<0.000000e+00> : vector<4xf32>
    %9 = vector.multi_reduction <add>, %8, %cst_5 [0] : vector<32x4xf32> to vector<4xf32>
    %10 = vector.shape_cast %9 : vector<4xf32> to vector<1x4xf32>
    %cst_6 = arith.constant 0.000000e+00 : f32
    %11 = vector.broadcast %cst_6 : f32 to vector<1x4xf32>
    %12 = arith.maximumf %10, %11 : vector<1x4xf32>
    %c0_7 = arith.constant 0 : index
    %c0_8 = arith.constant 0 : index
    %13 = vector.load %arg3[%c0_7, %c0_8] : memref<32x4xf32, #tpu.memory_space<vmem>>, vector<32x4xf32>
    %14 = vector.broadcast %12 : vector<1x4xf32> to vector<32x4xf32>
    %15 = arith.mulf %13, %14 : vector<32x4xf32>
    %cst_9 = arith.constant dense<0.000000e+00> : vector<32xf32>
    %16 = vector.multi_reduction <add>, %15, %cst_9 [1] : vector<32x4xf32> to vector<32xf32>
    %17 = vector.shape_cast %16 : vector<32xf32> to vector<32x1xf32>
    %18 = arith.negf %17 : vector<32x1xf32>
    %19 = math.exp %18 : vector<32x1xf32>
    %cst_10 = arith.constant 1.000000e+00 : f32
    %20 = vector.broadcast %cst_10 : f32 to vector<32x1xf32>
    %21 = arith.addf %20, %19 : vector<32x1xf32>
    %22 = arith.divf %20, %21 : vector<32x1xf32>
    %c0_11 = arith.constant 0 : index
    %c0_12 = arith.constant 0 : index
    %c0_13 = arith.constant 0 : index
    %23 = vector.load %arg1[%c0_11, %c0_12, %c0_13] : memref<1x32x4096xf32, #tpu.memory_space<vmem>>, vector<1x32x4096xf32>
    %24 = vector.shape_cast %23 : vector<1x32x4096xf32> to vector<32x4096xf32>
    %25 = vector.broadcast %22 : vector<32x1xf32> to vector<32x4096xf32>
    %26 = arith.mulf %24, %25 : vector<32x4096xf32>
    %c0_14 = arith.constant 0 : index
    %c0_15 = arith.constant 0 : index
    %c0_16 = arith.constant 0 : index
    %27 = vector.load %arg4[%c0_14, %c0_15, %c0_16] : memref<1x32x4096xf32, #tpu.memory_space<vmem>>, vector<1x32x4096xf32>
    %28 = vector.shape_cast %27 : vector<1x32x4096xf32> to vector<32x4096xf32>
    %29 = vector.shape_cast %26 : vector<32x4096xf32> to vector<1x32x4096xf32>
    tpu.vector_store %arg4[%c0_14, %c0_15, %c0_16], %29 {strides = array<i32>} : memref<1x32x4096xf32, #tpu.memory_space<vmem>>, vector<1x32x4096xf32>,
    return
  }
  func.func @transform_0(%arg0: i32) -> (i32, i32, i32) {
    %c0_i32 = arith.constant 0 : i32
    %c0_i32_0 = arith.constant 0 : i32
    %c0_i32_1 = arith.constant 0 : i32
    return %arg0, %c0_i32, %c0_i32_0 : i32, i32, i32
  }
  func.func @transform_1(%arg0: i32) -> (i32, i32) {
    %c0_i32 = arith.constant 0 : i32
    %c0_i32_0 = arith.constant 0 : i32
    %c0_i32_1 = arith.constant 0 : i32
    return %c0_i32, %c0_i32_0 : i32, i32
  }
  func.func @transform_2(%arg0: i32) -> (i32, i32) {
    %c0_i32 = arith.constant 0 : i32
    %c0_i32_0 = arith.constant 0 : i32
    %c0_i32_1 = arith.constant 0 : i32
    return %c0_i32, %c0_i32_0 : i32, i32
  }
  func.func @transform_3(%arg0: i32) -> (i32, i32, i32) {
    %c0_i32 = arith.constant 0 : i32
    %c0_i32_0 = arith.constant 0 : i32
    %c0_i32_1 = arith.constant 0 : i32
    return %arg0, %c0_i32, %c0_i32_0 : i32, i32, i32
  }
}

</mosaic_0001>

<llo_original>
// kernel: squeeze_excitation_pallas.1
$region0: #{squeeze_excitation_pallas.1}
  #allocation0 [shape = 'u32[]', space=smem, size = 0x4, offset = 0x4, fixed_abs, tag = 'smem constant byte address 0x4 - core index']
  #allocation1 [shape = 'u32[72,128]{1,0:T(1,128)}', space=vmem, size = 0x9000, scoped, tag = 'internal scratch']
  %s0 = inlined_call_operand.vmem [shape: f32[2,32,4096], index: 0, kind: input, shape index: {}, may-alias: {0,3}]
  %s1 = inlined_call_operand.vmem [shape: f32[32,4], index: 1, kind: input, shape index: {}]
  %s2 = inlined_call_operand.vmem [shape: f32[32,4], index: 2, kind: input, shape index: {}]
  %s3 = inlined_call_operand.vmem [shape: f32[2,32,4096], index: 3, kind: output, shape index: {}, may-alias: {0,3}]
  %s4 = sld [smem:[#allocation0]]
  $region45: #{squeeze_excitation_pallas.1} parent=0
    _
  %s6 = ssub.s32 1, %s4
  %s7 = scalar_select 0, %s6, %s4
  loop: start=0, step=1, limit=4
  $region2: #{squeeze_excitation_pallas.1} parent=0 // loop_pre_header
    _
  $region3: #{squeeze_excitation_pallas.1} parent=0 // loop_header
    %s9 = sphi 0, %s13
    %p10 = scmp.ge.s32.totalorder %s9, 4
    %s19 = sphi 0, %s21
    %s22 = sphi 0, %s19
    %s23 = sphi 0, %s22
    %s39 = sphi 0, %s23
    %s43 = sphi 0, %s43
    %s45 = sphi 0, %s43
    %s46 = sphi 0, %s45
    %s60 = sphi 0, %s46
    %s64 = sphi 0, %s64
    %s66 = sphi 0, %s64
    %s67 = sphi 0, %s66
    %s81 = sphi 0, %s67
    %s87 = sphi 0, %s89
    %s90 = sphi 0, %s87
    %s91 = sphi 0, %s90
    %s107 = sphi 0, %s91
  $region4: #{squeeze_excitation_pallas.1} parent=0 // loop_header_branch
    %12 = sbr.rel (%p10) target = $region8
  $region5: #{squeeze_excitation_pallas.1} parent=0 // loop_body
    %s14 = ssub.s32 %s9, 1
    %s15 = ssub.s32 %s9, 2
    %s16 = sadd.s32 %s9, 1
    %s17 = ssub.s32 %s9, %s16
    %p18 = scmp.eq.s32.totalorder %s17, 0
    %s20 = sadd.s32 %s19, 1
    %s21 = scalar_select %p18, %s19, %s20
    %p24 = pneg %p18
    %p25 = scmp.eq.s32.totalorder %s9, 1
    %p26 = por %p24, %p25
    %p27 = scmp.ne.s32.totalorder %s19, %s22
    %p28 = scmp.eq.s32.totalorder %s9, 0
    %p29 = por %p27, %p28
    %p30 = scmp.ne.s32.totalorder %s19, %s22
    %p31 = scmp.eq.s32.totalorder %s14, 1
    %p32 = por %p30, %p31
    %p33 = scmp.ne.s32.totalorder %s22, %s23
    %p34 = scmp.eq.s32.totalorder %s14, 0
    %p35 = por %p33, %p34
    %p36 = scmp.ne.s32.totalorder %s22, %s23
    %p37 = scmp.eq.s32.totalorder %s15, 1
    %p38 = por %p36, %p37
    %p40 = scmp.ne.s32.totalorder %s23, %s39
    %p41 = scmp.eq.s32.totalorder %s15, 0
    %p42 = por %p40, %p41
    %s44 = sadd.s32 %s43, 1
    %p47 = scmp.eq.s32.totalorder %s9, 1
    %p48 = scmp.ne.s32.totalorder %s43, %s45
    %p49 = scmp.eq.s32.totalorder %s9, 0
    %p50 = por %p48, %p49
    %p51 = scmp.ne.s32.totalorder %s43, %s45
    %p52 = scmp.eq.s32.totalorder %s14, 1
    %p53 = por %p51, %p52
    %p54 = scmp.ne.s32.totalorder %s45, %s46
    %p55 = scmp.eq.s32.totalorder %s14, 0
    %p56 = por %p54, %p55
    %p57 = scmp.ne.s32.totalorder %s45, %s46
    %p58 = scmp.eq.s32.totalorder %s15, 1
    %p59 = por %p57, %p58
    %p61 = scmp.ne.s32.totalorder %s46, %s60
    %p62 = scmp.eq.s32.totalorder %s15, 0
    %p63 = por %p61, %p62
    %s65 = sadd.s32 %s64, 1
    %p68 = scmp.eq.s32.totalorder %s9, 1
    %p69 = scmp.ne.s32.totalorder %s64, %s66
    %p70 = scmp.eq.s32.totalorder %s9, 0
    %p71 = por %p69, %p70
    %p72 = scmp.ne.s32.totalorder %s64, %s66
    %p73 = scmp.eq.s32.totalorder %s14, 1
    %p74 = por %p72, %p73
    %p75 = scmp.ne.s32.totalorder %s66, %s67
    %p76 = scmp.eq.s32.totalorder %s14, 0
    %p77 = por %p75, %p76
    %p78 = scmp.ne.s32.totalorder %s66, %s67
    %p79 = scmp.eq.s32.totalorder %s15, 1
    %p80 = por %p78, %p79
    %p82 = scmp.ne.s32.totalorder %s67, %s81
    %p83 = scmp.eq.s32.totalorder %s15, 0
    %p84 = por %p82, %p83
    %s85 = ssub.s32 %s9, %s16
    %p86 = scmp.eq.s32.totalorder %s85, 0
    %s88 = sadd.s32 %s87, 1
    %s89 = scalar_select %p86, %s87, %s88
    %p92 = pneg %p86
    %p93 = scmp.eq.s32.totalorder %s9, 1
    %p94 = por %p92, %p93
    %p95 = scmp.ne.s32.totalorder %s87, %s90
    %p96 = scmp.eq.s32.totalorder %s9, 0
    %p97 = por %p95, %p96
    %p98 = scmp.ne.s32.totalorder %s87, %s90
    %p99 = scmp.eq.s32.totalorder %s14, 1
    %p100 = por %p98, %p99
    %p101 = scmp.ne.s32.totalorder %s90, %s91
    %p102 = scmp.eq.s32.totalorder %s14, 0
    %p103 = por %p101, %p102
    %p104 = scmp.ne.s32.totalorder %s90, %s91
    %p105 = scmp.eq.s32.totalorder %s15, 1
    %p106 = por %p104, %p105
    %p108 = scmp.ne.s32.totalorder %s91, %s107
    %p109 = scmp.eq.s32.totalorder %s15, 0
    %p110 = por %p108, %p109
    %p111 = scmp.le.s32.totalorder 1, %s9
    %p112 = scmp.lt.s32.totalorder %s9, 3
    %p113 = pnand %p111, %p112
    %p114 = pneg %p113
    // Predicated region
    $region9: #{squeeze_excitation_pallas.1} parent=5 // pred_check
      _
    $region10: #{squeeze_excitation_pallas.1} parent=5 // pred_check_branch
      %116 = sbr.rel (%p113) target = $region12
    $region11: #{squeeze_excitation_pallas.1} parent=5 // pred_region
      %s117 = ssub.s32 %s9, 1
      // Predicated region
      $region13: #{squeeze_excitation_pallas.1} parent=11 // pred_check
        %p118 = pneg %p56
      $region14: #{squeeze_excitation_pallas.1} parent=11 // pred_check_branch
        %120 = sbr.rel (%p118) target = $region16
      $region15: #{squeeze_excitation_pallas.1} parent=11 // pred_region
        _
      $region16: #{squeeze_excitation_pallas.1} parent=11 // pred_fallthru
        _
      // Predicated region
      $region17: #{squeeze_excitation_pallas.1} parent=11 // pred_check
        %p121 = pneg %p77
      $region18: #{squeeze_excitation_pallas.1} parent=11 // pred_check_branch
        %123 = sbr.rel (%p121) target = $region20
      $region19: #{squeeze_excitation_pallas.1} parent=11 // pred_region
        _
      $region20: #{squeeze_excitation_pallas.1} parent=11 // pred_fallthru
        _
    $region12: #{squeeze_excitation_pallas.1} parent=5 // pred_fallthru
      _
    %p124 = scmp.lt.s32.totalorder %s9, 2
    // Predicated region
    $region21: #{squeeze_excitation_pallas.1} parent=5 // pred_check
      %p125 = pneg %p124
    $region22: #{squeeze_excitation_pallas.1} parent=5 // pred_check_branch
      %127 = sbr.rel (%p125) target = $region24
    $region23: #{squeeze_excitation_pallas.1} parent=5 // pred_region
      // Predicated region
      $region25: #{squeeze_excitation_pallas.1} parent=23 // pred_check
        %p128 = pneg %p29
      $region26: #{squeeze_excitation_pallas.1} parent=23 // pred_check_branch
        %130 = sbr.rel (%p128) target = $region28
      $region27: #{squeeze_excitation_pallas.1} parent=23 // pred_region
        %p131 = scmp.lt.s32.totalorder %s9, 1
        %s132 = scalar_select %p131, %s9, 1
        %s133 = smul.addr %s132, 128
        %s134 = smul.addr %s133, 8
        %s135 = scalar_lea.vmem %s0, %s134
      $region28: #{squeeze_excitation_pallas.1} parent=23 // pred_fallthru
        _
    $region24: #{squeeze_excitation_pallas.1} parent=5 // pred_fallthru
      _
    %p136 = scmp.le.s32.totalorder 1, %s9
    %p137 = scmp.lt.s32.totalorder %s9, 3
    %p138 = pnand %p136, %p137
    %p139 = pneg %p138
    // Predicated region
    $region29: #{squeeze_excitation_pallas.1} parent=5 // pred_check
      _
    $region30: #{squeeze_excitation_pallas.1} parent=5 // pred_check_branch
      %141 = sbr.rel (%p138) target = $region32
    $region31: #{squeeze_excitation_pallas.1} parent=5 // pred_region
      %s142 = ssub.s32 %s9, 1
      %p143 = scmp.lt.s32.totalorder %s14, 1
      %s144 = scalar_select %p143, %s14, 1
      %s145 = smul.addr %s144, 128
      %s146 = smul.addr %s145, 8
      %s147 = scalar_lea.vmem %s0, %s146
      %p148 = pneg %p35
      %p149 = pneg %p32
      %p150 = pneg %p56
      %p151 = pneg %p53
      %p152 = pneg %p77
      %p153 = pneg %p74
      %p154 = pneg %p103
      %p155 = pneg %p100
      %p156 = scmp.lt.s32.totalorder %s14, 1
      %s157 = scalar_select %p156, %s14, 1
      %s158 = smul.addr %s157, 128
      %s159 = smul.addr %s158, 8
      %s160 = scalar_lea.vmem %s3, %s159
      %p161 = scmp.lt.s32.totalorder %s14, 1
      %s162 = scalar_select %p161, %s14, 1
      %s163 = smul.addr %s162, 128
      %s164 = smul.addr %s163, 8
      %s165 = scalar_lea.vmem %s0, %s164
      %p166 = scmp.lt.s32.totalorder %s14, 1
      %s167 = scalar_select %p166, %s14, 1
      %s168 = smul.addr %s167, 128
      %s169 = smul.addr %s168, 8
      %s170 = scalar_lea.vmem %s3, %s169
      %v171 = vld [vmem:[%s165] sm:$0xff]
      %v172 = vld [vmem:[%s165 + $0x8] sm:$0xff]
      %v173 = vld [vmem:[%s165 + $0x10] sm:$0xff]
      %v174 = vld [vmem:[%s165 + $0x18] sm:$0xff]
      %v175 = vld [vmem:[%s165 + $0x20] sm:$0xff]
      %v176 = vld [vmem:[%s165 + $0x28] sm:$0xff]
      %v177 = vld [vmem:[%s165 + $0x30] sm:$0xff]
      %v178 = vld [vmem:[%s165 + $0x38] sm:$0xff]
      %v179 = vld [vmem:[%s165 + $0x40] sm:$0xff]
      %v180 = vld [vmem:[%s165 + $0x48] sm:$0xff]
      %v181 = vld [vmem:[%s165 + $0x50] sm:$0xff]
      %v182 = vld [vmem:[%s165 + $0x58] sm:$0xff]
      %v183 = vld [vmem:[%s165 + $0x60] sm:$0xff]
      %v184 = vld [vmem:[%s165 + $0x68] sm:$0xff]
      %v185 = vld [vmem:[%s165 + $0x70] sm:$0xff]
      %v186 = vld [vmem:[%s165 + $0x78] sm:$0xff]
      %v187 = vld [vmem:[%s165 + $0x80] sm:$0xff]
      %v188 = vld [vmem:[%s165 + $0x88] sm:$0xff]
      %v189 = vld [vmem:[%s165 + $0x90] sm:$0xff]
      %v190 = vld [vmem:[%s165 + $0x98] sm:$0xff]
      %v191 = vld [vmem:[%s165 + $0xa0] sm:$0xff]
      %v192 = vld [vmem:[%s165 + $0xa8] sm:$0xff]
      %v193 = vld [vmem:[%s165 + $0xb0] sm:$0xff]
      %v194 = vld [vmem:[%s165 + $0xb8] sm:$0xff]
      %v195 = vld [vmem:[%s165 + $0xc0] sm:$0xff]
      %v196 = vld [vmem:[%s165 + $0xc8] sm:$0xff]
      %v197 = vld [vmem:[%s165 + $0xd0] sm:$0xff]
      %v198 = vld [vmem:[%s165 + $0xd8] sm:$0xff]
      %v199 = vld [vmem:[%s165 + $0xe0] sm:$0xff]
      %v200 = vld [vmem:[%s165 + $0xe8] sm:$0xff]
      %v201 = vld [vmem:[%s165 + $0xf0] sm:$0xff]
      %v202 = vld [vmem:[%s165 + $0xf8] sm:$0xff]
      %v203 = vld [vmem:[%s165 + $0x100] sm:$0xff]
      %v204 = vld [vmem:[%s165 + $0x108] sm:$0xff]
      %v205 = vld [vmem:[%s165 + $0x110] sm:$0xff]
      %v206 = vld [vmem:[%s165 + $0x118] sm:$0xff]
      %v207 = vld [vmem:[%s165 + $0x120] sm:$0xff]
      %v208 = vld [vmem:[%s165 + $0x128] sm:$0xff]
      %v209 = vld [vmem:[%s165 + $0x130] sm:$0xff]
      %v210 = vld [vmem:[%s165 + $0x138] sm:$0xff]
      %v211 = vld [vmem:[%s165 + $0x140] sm:$0xff]
      %v212 = vld [vmem:[%s165 + $0x148] sm:$0xff]
      %v213 = vld [vmem:[%s165 + $0x150] sm:$0xff]
      %v214 = vld [vmem:[%s165 + $0x158] sm:$0xff]
      %v215 = vld [vmem:[%s165 + $0x160] sm:$0xff]
      %v216 = vld [vmem:[%s165 + $0x168] sm:$0xff]
      %v217 = vld [vmem:[%s165 + $0x170] sm:$0xff]
      %v218 = vld [vmem:[%s165 + $0x178] sm:$0xff]
      %v219 = vld [vmem:[%s165 + $0x180] sm:$0xff]
      %v220 = vld [vmem:[%s165 + $0x188] sm:$0xff]
      %v221 = vld [vmem:[%s165 + $0x190] sm:$0xff]
      %v222 = vld [vmem:[%s165 + $0x198] sm:$0xff]
      %v223 = vld [vmem:[%s165 + $0x1a0] sm:$0xff]
      %v224 = vld [vmem:[%s165 + $0x1a8] sm:$0xff]
      %v225 = vld [vmem:[%s165 + $0x1b0] sm:$0xff]
      %v226 = vld [vmem:[%s165 + $0x1b8] sm:$0xff]
      %v227 = vld [vmem:[%s165 + $0x1c0] sm:$0xff]
      %v228 = vld [vmem:[%s165 + $0x1c8] sm:$0xff]
      %v229 = vld [vmem:[%s165 + $0x1d0] sm:$0xff]
      %v230 = vld [vmem:[%s165 + $0x1d8] sm:$0xff]
      %v231 = vld [vmem:[%s165 + $0x1e0] sm:$0xff]
      %v232 = vld [vmem:[%s165 + $0x1e8] sm:$0xff]
      %v233 = vld [vmem:[%s165 + $0x1f0] sm:$0xff]
      %v234 = vld [vmem:[%s165 + $0x1f8] sm:$0xff]
      %v235 = vld [vmem:[%s165 + $0x200] sm:$0xff]
      %v236 = vld [vmem:[%s165 + $0x208] sm:$0xff]
      %v237 = vld [vmem:[%s165 + $0x210] sm:$0xff]
      %v238 = vld [vmem:[%s165 + $0x218] sm:$0xff]
      %v239 = vld [vmem:[%s165 + $0x220] sm:$0xff]
      %v240 = vld [vmem:[%s165 + $0x228] sm:$0xff]
      %v241 = vld [vmem:[%s165 + $0x230] sm:$0xff]
      %v242 = vld [vmem:[%s165 + $0x238] sm:$0xff]
      %v243 = vld [vmem:[%s165 + $0x240] sm:$0xff]
      %v244 = vld [vmem:[%s165 + $0x248] sm:$0xff]
      %v245 = vld [vmem:[%s165 + $0x250] sm:$0xff]
      %v246 = vld [vmem:[%s165 + $0x258] sm:$0xff]
      %v247 = vld [vmem:[%s165 + $0x260] sm:$0xff]
      %v248 = vld [vmem:[%s165 + $0x268] sm:$0xff]
      %v249 = vld [vmem:[%s165 + $0x270] sm:$0xff]
      %v250 = vld [vmem:[%s165 + $0x278] sm:$0xff]
      %v251 = vld [vmem:[%s165 + $0x280] sm:$0xff]
      %v252 = vld [vmem:[%s165 + $0x288] sm:$0xff]
      %v253 = vld [vmem:[%s165 + $0x290] sm:$0xff]
      %v254 = vld [vmem:[%s165 + $0x298] sm:$0xff]
      %v255 = vld [vmem:[%s165 + $0x2a0] sm:$0xff]
      %v256 = vld [vmem:[%s165 + $0x2a8] sm:$0xff]
      %v257 = vld [vmem:[%s165 + $0x2b0] sm:$0xff]
      %v258 = vld [vmem:[%s165 + $0x2b8] sm:$0xff]
      %v259 = vld [vmem:[%s165 + $0x2c0] sm:$0xff]
      %v260 = vld [vmem:[%s165 + $0x2c8] sm:$0xff]
      %v261 = vld [vmem:[%s165 + $0x2d0] sm:$0xff]
      %v262 = vld [vmem:[%s165 + $0x2d8] sm:$0xff]
      %v263 = vld [vmem:[%s165 + $0x2e0] sm:$0xff]
      %v264 = vld [vmem:[%s165 + $0x2e8] sm:$0xff]
      %v265 = vld [vmem:[%s165 + $0x2f0] sm:$0xff]
      %v266 = vld [vmem:[%s165 + $0x2f8] sm:$0xff]
      %v267 = vld [vmem:[%s165 + $0x300] sm:$0xff]
      %v268 = vld [vmem:[%s165 + $0x308] sm:$0xff]
      %v269 = vld [vmem:[%s165 + $0x310] sm:$0xff]
      %v270 = vld [vmem:[%s165 + $0x318] sm:$0xff]
      %v271 = vld [vmem:[%s165 + $0x320] sm:$0xff]
      %v272 = vld [vmem:[%s165 + $0x328] sm:$0xff]
      %v273 = vld [vmem:[%s165 + $0x330] sm:$0xff]
      %v274 = vld [vmem:[%s165 + $0x338] sm:$0xff]
      %v275 = vld [vmem:[%s165 + $0x340] sm:$0xff]
      %v276 = vld [vmem:[%s165 + $0x348] sm:$0xff]
      %v277 = vld [vmem:[%s165 + $0x350] sm:$0xff]
      %v278 = vld [vmem:[%s165 + $0x358] sm:$0xff]
      %v279 = vld [vmem:[%s165 + $0x360] sm:$0xff]
      %v280 = vld [vmem:[%s165 + $0x368] sm:$0xff]
      %v281 = vld [vmem:[%s165 + $0x370] sm:$0xff]
      %v282 = vld [vmem:[%s165 + $0x378] sm:$0xff]
      %v283 = vld [vmem:[%s165 + $0x380] sm:$0xff]
      %v284 = vld [vmem:[%s165 + $0x388] sm:$0xff]
      %v285 = vld [vmem:[%s165 + $0x390] sm:$0xff]
      %v286 = vld [vmem:[%s165 + $0x398] sm:$0xff]
      %v287 = vld [vmem:[%s165 + $0x3a0] sm:$0xff]
      %v288 = vld [vmem:[%s165 + $0x3a8] sm:$0xff]
      %v289 = vld [vmem:[%s165 + $0x3b0] sm:$0xff]
      %v290 = vld [vmem:[%s165 + $0x3b8] sm:$0xff]
      %v291 = vld [vmem:[%s165 + $0x3c0] sm:$0xff]
      %v292 = vld [vmem:[%s165 + $0x3c8] sm:$0xff]
      %v293 = vld [vmem:[%s165 + $0x3d0] sm:$0xff]
      %v294 = vld [vmem:[%s165 + $0x3d8] sm:$0xff]
      %v295 = vld [vmem:[%s165 + $0x3e0] sm:$0xff]
      %v296 = vld [vmem:[%s165 + $0x3e8] sm:$0xff]
      %v297 = vld [vmem:[%s165 + $0x3f0] sm:$0xff]
      %v298 = vld [vmem:[%s165 + $0x3f8] sm:$0xff]
      %v299 = vadd.f32 %v171, %v172
      %v300 = vadd.f32 %v299, %v173
      %v301 = vadd.f32 %v300, %v174
      %v302 = vadd.f32 %v301, %v175
      %v303 = vadd.f32 %v302, %v176
      %v304 = vadd.f32 %v303, %v177
      %v305 = vadd.f32 %v304, %v178
      %v306 = vadd.f32 %v305, %v179
      %v307 = vadd.f32 %v306, %v180
      %v308 = vadd.f32 %v307, %v181
      %v309 = vadd.f32 %v308, %v182
      %v310 = vadd.f32 %v309, %v183
      %v311 = vadd.f32 %v310, %v184
      %v312 = vadd.f32 %v311, %v185
      %v313 = vadd.f32 %v312, %v186
      %v314 = vadd.f32 %v313, %v187
      %v315 = vadd.f32 %v314, %v188
      %v316 = vadd.f32 %v315, %v189
      %v317 = vadd.f32 %v316, %v190
      %v318 = vadd.f32 %v317, %v191
      %v319 = vadd.f32 %v318, %v192
      %v320 = vadd.f32 %v319, %v193
      %v321 = vadd.f32 %v320, %v194
      %v322 = vadd.f32 %v321, %v195
      %v323 = vadd.f32 %v322, %v196
      %v324 = vadd.f32 %v323, %v197
      %v325 = vadd.f32 %v324, %v198
      %v326 = vadd.f32 %v325, %v199
      %v327 = vadd.f32 %v326, %v200
      %v328 = vadd.f32 %v327, %v201
      %v329 = vadd.f32 %v328, %v202
      %330 = vadd.xlane.f32.xlu0 %v329
      %v331 = vpop.xlane.xlu0 %330
      %v332 = vadd.f32 %v203, %v204
      %v333 = vadd.f32 %v332, %v205
      %v334 = vadd.f32 %v333, %v206
      %v335 = vadd.f32 %v334, %v207
      %v336 = vadd.f32 %v335, %v208
      %v337 = vadd.f32 %v336, %v209
      %v338 = vadd.f32 %v337, %v210
      %v339 = vadd.f32 %v338, %v211
      %v340 = vadd.f32 %v339, %v212
      %v341 = vadd.f32 %v340, %v213
      %v342 = vadd.f32 %v341, %v214
      %v343 = vadd.f32 %v342, %v215
      %v344 = vadd.f32 %v343, %v216
      %v345 = vadd.f32 %v344, %v217
      %v346 = vadd.f32 %v345, %v218
      %v347 = vadd.f32 %v346, %v219
      %v348 = vadd.f32 %v347, %v220
      %v349 = vadd.f32 %v348, %v221
      %v350 = vadd.f32 %v349, %v222
      %v351 = vadd.f32 %v350, %v223
      %v352 = vadd.f32 %v351, %v224
      %v353 = vadd.f32 %v352, %v225
      %v354 = vadd.f32 %v353, %v226
      %v355 = vadd.f32 %v354, %v227
      %v356 = vadd.f32 %v355, %v228
      %v357 = vadd.f32 %v356, %v229
      %v358 = vadd.f32 %v357, %v230
      %v359 = vadd.f32 %v358, %v231
      %v360 = vadd.f32 %v359, %v232
      %v361 = vadd.f32 %v360, %v233
      %v362 = vadd.f32 %v361, %v234
      %363 = vadd.xlane.f32.xlu0 %v362
      %v364 = vpop.xlane.xlu0 %363
      %v365 = vadd.f32 %v235, %v236
      %v366 = vadd.f32 %v365, %v237
      %v367 = vadd.f32 %v366, %v238
      %v368 = vadd.f32 %v367, %v239
      %v369 = vadd.f32 %v368, %v240
      %v370 = vadd.f32 %v369, %v241
      %v371 = vadd.f32 %v370, %v242
      %v372 = vadd.f32 %v371, %v243
      %v373 = vadd.f32 %v372, %v244
      %v374 = vadd.f32 %v373, %v245
      %v375 = vadd.f32 %v374, %v246
      %v376 = vadd.f32 %v375, %v247
      %v377 = vadd.f32 %v376, %v248
      %v378 = vadd.f32 %v377, %v249
      %v379 = vadd.f32 %v378, %v250
      %v380 = vadd.f32 %v379, %v251
      %v381 = vadd.f32 %v380, %v252
      %v382 = vadd.f32 %v381, %v253
      %v383 = vadd.f32 %v382, %v254
      %v384 = vadd.f32 %v383, %v255
      %v385 = vadd.f32 %v384, %v256
      %v386 = vadd.f32 %v385, %v257
      %v387 = vadd.f32 %v386, %v258
      %v388 = vadd.f32 %v387, %v259
      %v389 = vadd.f32 %v388, %v260
      %v390 = vadd.f32 %v389, %v261
      %v391 = vadd.f32 %v390, %v262
      %v392 = vadd.f32 %v391, %v263
      %v393 = vadd.f32 %v392, %v264
      %v394 = vadd.f32 %v393, %v265
      %v395 = vadd.f32 %v394, %v266
      %396 = vadd.xlane.f32.xlu0 %v395
      %v397 = vpop.xlane.xlu0 %396
      %v398 = vadd.f32 %v267, %v268
      %v399 = vadd.f32 %v398, %v269
      %v400 = vadd.f32 %v399, %v270
      %v401 = vadd.f32 %v400, %v271
      %v402 = vadd.f32 %v401, %v272
      %v403 = vadd.f32 %v402, %v273
      %v404 = vadd.f32 %v403, %v274
      %v405 = vadd.f32 %v404, %v275
      %v406 = vadd.f32 %v405, %v276
      %v407 = vadd.f32 %v406, %v277
      %v408 = vadd.f32 %v407, %v278
      %v409 = vadd.f32 %v408, %v279
      %v410 = vadd.f32 %v409, %v280
      %v411 = vadd.f32 %v410, %v281
      %v412 = vadd.f32 %v411, %v282
      %v413 = vadd.f32 %v412, %v283
      %v414 = vadd.f32 %v413, %v284
      %v415 = vadd.f32 %v414, %v285
      %v416 = vadd.f32 %v415, %v286
      %v417 = vadd.f32 %v416, %v287
      %v418 = vadd.f32 %v417, %v288
      %v419 = vadd.f32 %v418, %v289
      %v420 = vadd.f32 %v419, %v290
      %v421 = vadd.f32 %v420, %v291
      %v422 = vadd.f32 %v421, %v292
      %v423 = vadd.f32 %v422, %v293
      %v424 = vadd.f32 %v423, %v294
      %v425 = vadd.f32 %v424, %v295
      %v426 = vadd.f32 %v425, %v296
      %v427 = vadd.f32 %v426, %v297
      %v428 = vadd.f32 %v427, %v298
      %429 = vadd.xlane.f32.xlu0 %v428
      %v430 = vpop.xlane.xlu0 %429
      %v431 = vmul.f32 %v331, 0.00024414063
      %v432 = vmul.f32 %v364, 0.00024414063
      %v433 = vmul.f32 %v397, 0.00024414063
      %v434 = vmul.f32 %v430, 0.00024414063
      %v435 = vld [vmem:[%s1] sm:$0xff]
      %v436 = vld [vmem:[%s1 + $0x8] sm:$0xff]
      %v437 = vld [vmem:[%s1 + $0x10] sm:$0xff]
      %v438 = vld [vmem:[%s1 + $0x18] sm:$0xff]
      %v439 = vmul.f32 %v435, %v431
      %v440 = vmul.f32 %v436, %v432
      %v441 = vmul.f32 %v437, %v433
      %v442 = vmul.f32 %v438, %v434
      %vm443 = vcmask 31744
      %v444 = vsel %vm443, %v439, 0.0
      %v445 = vsel %vm443, %v440, 0.0
      %v446 = vadd.f32 %v444, %v445
      %v447 = vsel %vm443, %v441, 0.0
      %v448 = vadd.f32 %v446, %v447
      %v449 = vsel %vm443, %v442, 0.0
      %v450 = vadd.f32 %v448, %v449
      %v451 = vrot.slane %v450, 4
      %v452 = vadd.f32 %v450, %v451
      %v453 = vrot.slane %v452, 2
      %v454 = vadd.f32 %v452, %v453
      %v455 = vrot.slane %v454, 1
      %v456 = vadd.f32 %v454, %v455
      %v457 = vmax.f32 %v456, 0.0
      %v458 = vld [vmem:[%s2] sm:$0xff]
      %v459 = vld [vmem:[%s2 + $0x8] sm:$0xff]
      %v460 = vld [vmem:[%s2 + $0x10] sm:$0xff]
      %v461 = vld [vmem:[%s2 + $0x18] sm:$0xff]
      %v462 = vmul.f32 %v458, %v457
      %v463 = vmul.f32 %v459, %v457
      %v464 = vmul.f32 %v460, %v457
      %v465 = vmul.f32 %v461, %v457
      %v466 = vsel %vm443, %v462, 0.0
      %467 = vadd.xlane.f32.xlu0 %v466
      %v468 = vpop.xlane.xlu0 %467
      %v469 = vsel %vm443, %v463, 0.0
      %470 = vadd.xlane.f32.xlu0 %v469
      %v471 = vpop.xlane.xlu0 %470
      %v472 = vsel %vm443, %v464, 0.0
      %473 = vadd.xlane.f32.xlu0 %v472
      %v474 = vpop.xlane.xlu0 %473
      %v475 = vsel %vm443, %v465, 0.0
      %476 = vadd.xlane.f32.xlu0 %v475
      %v477 = vpop.xlane.xlu0 %476
      %v478 = vxor.u32 %v468, 2147483648
      %v479 = vxor.u32 %v471, 2147483648
      %v480 = vxor.u32 %v474, 2147483648
      %v481 = vxor.u32 %v477, 2147483648
      %v482 = vmul.f32 %v478, 1.442695
      %v483 = vpow.pop %v482
      %v484 = vmul.f32 %v479, 1.442695
      %v485 = vpow.pop %v484
      %v486 = vmul.f32 %v480, 1.442695
      %v487 = vpow.pop %v486
      %v488 = vmul.f32 %v481, 1.442695
      %v489 = vpow.pop %v488
      %v490 = vadd.f32 %v483, 1.0
      %v491 = vadd.f32 %v485, 1.0
      %v492 = vadd.f32 %v487, 1.0
      %v493 = vadd.f32 %v489, 1.0
      %v494 = vrcp.pop %v490
      %v495 = vmul.f32 %v490, %v494
      %v496 = vsub.f32 1.0, %v495
      %v497 = vmul.f32 %v494, %v496
      %v498 = vadd.f32 %v494, %v497
      %vm499 = vweird.f32 %v490
      %vm500 = vweird.f32 %v494
      %vm501 = vmor %vm499, %vm500
      %v502 = vsel %vm501, %v494, %v498
      %v503 = vand.u32 2147483647, %v490
      %vm504 = vcmp.eq.f32.partialorder %v503, 8.507059e+37
      %v505 = vand.u32 %v490, 2147483648
      %v506 = vor.u32 1.1754944e-38, %v505
      %v507 = vsel %vm504, %v506, %v502
      %v508 = vmul.f32 1.0, %v507
      %v509 = vrcp.pop %v491
      %v510 = vmul.f32 %v491, %v509
      %v511 = vsub.f32 1.0, %v510
      %v512 = vmul.f32 %v509, %v511
      %v513 = vadd.f32 %v509, %v512
      %vm514 = vweird.f32 %v491
      %vm515 = vweird.f32 %v509
      %vm516 = vmor %vm514, %vm515
      %v517 = vsel %vm516, %v509, %v513
      %v518 = vand.u32 2147483647, %v491
      %vm519 = vcmp.eq.f32.partialorder %v518, 8.507059e+37
      %v520 = vand.u32 %v491, 2147483648
      %v521 = vor.u32 1.1754944e-38, %v520
      %v522 = vsel %vm519, %v521, %v517
      %v523 = vmul.f32 1.0, %v522
      %v524 = vrcp.pop %v492
      %v525 = vmul.f32 %v492, %v524
      %v526 = vsub.f32 1.0, %v525
      %v527 = vmul.f32 %v524, %v526
      %v528 = vadd.f32 %v524, %v527
      %vm529 = vweird.f32 %v492
      %vm530 = vweird.f32 %v524
      %vm531 = vmor %vm529, %vm530
      %v532 = vsel %vm531, %v524, %v528
      %v533 = vand.u32 2147483647, %v492
      %vm534 = vcmp.eq.f32.partialorder %v533, 8.507059e+37
      %v535 = vand.u32 %v492, 2147483648
      %v536 = vor.u32 1.1754944e-38, %v535
      %v537 = vsel %vm534, %v536, %v532
      %v538 = vmul.f32 1.0, %v537
      %v539 = vrcp.pop %v493
      %v540 = vmul.f32 %v493, %v539
      %v541 = vsub.f32 1.0, %v540
      %v542 = vmul.f32 %v539, %v541
      %v543 = vadd.f32 %v539, %v542
      %vm544 = vweird.f32 %v493
      %vm545 = vweird.f32 %v539
      %vm546 = vmor %vm544, %vm545
      %v547 = vsel %vm546, %v539, %v543
      %v548 = vand.u32 2147483647, %v493
      %vm549 = vcmp.eq.f32.partialorder %v548, 8.507059e+37
      %v550 = vand.u32 %v493, 2147483648
      %v551 = vor.u32 1.1754944e-38, %v550
      %v552 = vsel %vm549, %v551, %v547
      %v553 = vmul.f32 1.0, %v552
      %v554 = vmul.f32 %v171, %v508
      %v555 = vmul.f32 %v172, %v508
      %v556 = vmul.f32 %v173, %v508
      %v557 = vmul.f32 %v174, %v508
      %v558 = vmul.f32 %v175, %v508
      %v559 = vmul.f32 %v176, %v508
      %v560 = vmul.f32 %v177, %v508
      %v561 = vmul.f32 %v178, %v508
      %v562 = vmul.f32 %v179, %v508
      %v563 = vmul.f32 %v180, %v508
      %v564 = vmul.f32 %v181, %v508
      %v565 = vmul.f32 %v182, %v508
      %v566 = vmul.f32 %v183, %v508
      %v567 = vmul.f32 %v184, %v508
      %v568 = vmul.f32 %v185, %v508
      %v569 = vmul.f32 %v186, %v508
      %v570 = vmul.f32 %v187, %v508
      %v571 = vmul.f32 %v188, %v508
      %v572 = vmul.f32 %v189, %v508
      %v573 = vmul.f32 %v190, %v508
      %v574 = vmul.f32 %v191, %v508
      %v575 = vmul.f32 %v192, %v508
      %v576 = vmul.f32 %v193, %v508
      %v577 = vmul.f32 %v194, %v508
      %v578 = vmul.f32 %v195, %v508
      %v579 = vmul.f32 %v196, %v508
      %v580 = vmul.f32 %v197, %v508
      %v581 = vmul.f32 %v198, %v508
      %v582 = vmul.f32 %v199, %v508
      %v583 = vmul.f32 %v200, %v508
      %v584 = vmul.f32 %v201, %v508
      %v585 = vmul.f32 %v202, %v508
      %v586 = vmul.f32 %v203, %v523
      %v587 = vmul.f32 %v204, %v523
      %v588 = vmul.f32 %v205, %v523
      %v589 = vmul.f32 %v206, %v523
      %v590 = vmul.f32 %v207, %v523
      %v591 = vmul.f32 %v208, %v523
      %v592 = vmul.f32 %v209, %v523
      %v593 = vmul.f32 %v210, %v523
      %v594 = vmul.f32 %v211, %v523
      %v595 = vmul.f32 %v212, %v523
      %v596 = vmul.f32 %v213, %v523
      %v597 = vmul.f32 %v214, %v523
      %v598 = vmul.f32 %v215, %v523
      %v599 = vmul.f32 %v216, %v523
      %v600 = vmul.f32 %v217, %v523
      %v601 = vmul.f32 %v218, %v523
      %v602 = vmul.f32 %v219, %v523
      %v603 = vmul.f32 %v220, %v523
      %v604 = vmul.f32 %v221, %v523
      %v605 = vmul.f32 %v222, %v523
      %v606 = vmul.f32 %v223, %v523
      %v607 = vmul.f32 %v224, %v523
      %v608 = vmul.f32 %v225, %v523
      %v609 = vmul.f32 %v226, %v523
      %v610 = vmul.f32 %v227, %v523
      %v611 = vmul.f32 %v228, %v523
      %v612 = vmul.f32 %v229, %v523
      %v613 = vmul.f32 %v230, %v523
      %v614 = vmul.f32 %v231, %v523
      %v615 = vmul.f32 %v232, %v523
      %v616 = vmul.f32 %v233, %v523
      %v617 = vmul.f32 %v234, %v523
      %v618 = vmul.f32 %v235, %v538
      %v619 = vmul.f32 %v236, %v538
      %v620 = vmul.f32 %v237, %v538
      %v621 = vmul.f32 %v238, %v538
      %v622 = vmul.f32 %v239, %v538
      %v623 = vmul.f32 %v240, %v538
      %v624 = vmul.f32 %v241, %v538
      %v625 = vmul.f32 %v242, %v538
      %v626 = vmul.f32 %v243, %v538
      %v627 = vmul.f32 %v244, %v538
      %v628 = vmul.f32 %v245, %v538
      %v629 = vmul.f32 %v246, %v538
      %v630 = vmul.f32 %v247, %v538
      %v631 = vmul.f32 %v248, %v538
      %v632 = vmul.f32 %v249, %v538
      %v633 = vmul.f32 %v250, %v538
      %v634 = vmul.f32 %v251, %v538
      %v635 = vmul.f32 %v252, %v538
      %v636 = vmul.f32 %v253, %v538
      %v637 = vmul.f32 %v254, %v538
      %v638 = vmul.f32 %v255, %v538
      %v639 = vmul.f32 %v256, %v538
      %v640 = vmul.f32 %v257, %v538
      %v641 = vmul.f32 %v258, %v538
      %v642 = vmul.f32 %v259, %v538
      %v643 = vmul.f32 %v260, %v538
      %v644 = vmul.f32 %v261, %v538
      %v645 = vmul.f32 %v262, %v538
      %v646 = vmul.f32 %v263, %v538
      %v647 = vmul.f32 %v264, %v538
      %v648 = vmul.f32 %v265, %v538
      %v649 = vmul.f32 %v266, %v538
      %v650 = vmul.f32 %v267, %v553
      %v651 = vmul.f32 %v268, %v553
      %v652 = vmul.f32 %v269, %v553
      %v653 = vmul.f32 %v270, %v553
      %v654 = vmul.f32 %v271, %v553
      %v655 = vmul.f32 %v272, %v553
      %v656 = vmul.f32 %v273, %v553
      %v657 = vmul.f32 %v274, %v553
      %v658 = vmul.f32 %v275, %v553
      %v659 = vmul.f32 %v276, %v553
      %v660 = vmul.f32 %v277, %v553
      %v661 = vmul.f32 %v278, %v553
      %v662 = vmul.f32 %v279, %v553
      %v663 = vmul.f32 %v280, %v553
      %v664 = vmul.f32 %v281, %v553
      %v665 = vmul.f32 %v282, %v553
      %v666 = vmul.f32 %v283, %v553
      %v667 = vmul.f32 %v284, %v553
      %v668 = vmul.f32 %v285, %v553
      %v669 = vmul.f32 %v286, %v553
      %v670 = vmul.f32 %v287, %v553
      %v671 = vmul.f32 %v288, %v553
      %v672 = vmul.f32 %v289, %v553
      %v673 = vmul.f32 %v290, %v553
      %v674 = vmul.f32 %v291, %v553
      %v675 = vmul.f32 %v292, %v553
      %v676 = vmul.f32 %v293, %v553
      %v677 = vmul.f32 %v294, %v553
      %v678 = vmul.f32 %v295, %v553
      %v679 = vmul.f32 %v296, %v553
      %v680 = vmul.f32 %v297, %v553
      %v681 = vmul.f32 %v298, %v553
      %682 = vst [vmem:[%s170] sm:$0xff] %v554
      %683 = vst [vmem:[%s170 + $0x8] sm:$0xff] %v555
      %684 = vst [vmem:[%s170 + $0x10] sm:$0xff] %v556
      %685 = vst [vmem:[%s170 + $0x18] sm:$0xff] %v557
      %686 = vst [vmem:[%s170 + $0x20] sm:$0xff] %v558
      %687 = vst [vmem:[%s170 + $0x28] sm:$0xff] %v559
      %688 = vst [vmem:[%s170 + $0x30] sm:$0xff] %v560
      %689 = vst [vmem:[%s170 + $0x38] sm:$0xff] %v561
      %690 = vst [vmem:[%s170 + $0x40] sm:$0xff] %v562
      %691 = vst [vmem:[%s170 + $0x48] sm:$0xff] %v563
      %692 = vst [vmem:[%s170 + $0x50] sm:$0xff] %v564
      %693 = vst [vmem:[%s170 + $0x58] sm:$0xff] %v565
      %694 = vst [vmem:[%s170 + $0x60] sm:$0xff] %v566
      %695 = vst [vmem:[%s170 + $0x68] sm:$0xff] %v567
      %696 = vst [vmem:[%s170 + $0x70] sm:$0xff] %v568
      %697 = vst [vmem:[%s170 + $0x78] sm:$0xff] %v569
      %698 = vst [vmem:[%s170 + $0x80] sm:$0xff] %v570
      %699 = vst [vmem:[%s170 + $0x88] sm:$0xff] %v571
      %700 = vst [vmem:[%s170 + $0x90] sm:$0xff] %v572
      %701 = vst [vmem:[%s170 + $0x98] sm:$0xff] %v573
      %702 = vst [vmem:[%s170 + $0xa0] sm:$0xff] %v574
      %703 = vst [vmem:[%s170 + $0xa8] sm:$0xff] %v575
      %704 = vst [vmem:[%s170 + $0xb0] sm:$0xff] %v576
      %705 = vst [vmem:[%s170 + $0xb8] sm:$0xff] %v577
      %706 = vst [vmem:[%s170 + $0xc0] sm:$0xff] %v578
      %707 = vst [vmem:[%s170 + $0xc8] sm:$0xff] %v579
      %708 = vst [vmem:[%s170 + $0xd0] sm:$0xff] %v580
      %709 = vst [vmem:[%s170 + $0xd8] sm:$0xff] %v581
      %710 = vst [vmem:[%s170 + $0xe0] sm:$0xff] %v582
      %711 = vst [vmem:[%s170 + $0xe8] sm:$0xff] %v583
      %712 = vst [vmem:[%s170 + $0xf0] sm:$0xff] %v584
      %713 = vst [vmem:[%s170 + $0xf8] sm:$0xff] %v585
      %714 = vst [vmem:[%s170 + $0x100] sm:$0xff] %v586
      %715 = vst [vmem:[%s170 + $0x108] sm:$0xff] %v587
      %716 = vst [vmem:[%s170 + $0x110] sm:$0xff] %v588
      %717 = vst [vmem:[%s170 + $0x118] sm:$0xff] %v589
      %718 = vst [vmem:[%s170 + $0x120] sm:$0xff] %v590
      %719 = vst [vmem:[%s170 + $0x128] sm:$0xff] %v591
      %720 = vst [vmem:[%s170 + $0x130] sm:$0xff] %v592
      %721 = vst [vmem:[%s170 + $0x138] sm:$0xff] %v593
      %722 = vst [vmem:[%s170 + $0x140] sm:$0xff] %v594
      %723 = vst [vmem:[%s170 + $0x148] sm:$0xff] %v595
      %724 = vst [vmem:[%s170 + $0x150] sm:$0xff] %v596
      %725 = vst [vmem:[%s170 + $0x158] sm:$0xff] %v597
      %726 = vst [vmem:[%s170 + $0x160] sm:$0xff] %v598
      %727 = vst [vmem:[%s170 + $0x168] sm:$0xff] %v599
      %728 = vst [vmem:[%s170 + $0x170] sm:$0xff] %v600
      %729 = vst [vmem:[%s170 + $0x178] sm:$0xff] %v601
      %730 = vst [vmem:[%s170 + $0x180] sm:$0xff] %v602
      %731 = vst [vmem:[%s170 + $0x188] sm:$0xff] %v603
      %732 = vst [vmem:[%s170 + $0x190] sm:$0xff] %v604
      %733 = vst [vmem:[%s170 + $0x198] sm:$0xff] %v605
      %734 = vst [vmem:[%s170 + $0x1a0] sm:$0xff] %v606
      %735 = vst [vmem:[%s170 + $0x1a8] sm:$0xff] %v607
      %736 = vst [vmem:[%s170 + $0x1b0] sm:$0xff] %v608
      %737 = vst [vmem:[%s170 + $0x1b8] sm:$0xff] %v609
      %738 = vst [vmem:[%s170 + $0x1c0] sm:$0xff] %v610
      %739 = vst [vmem:[%s170 + $0x1c8] sm:$0xff] %v611
      %740 = vst [vmem:[%s170 + $0x1d0] sm:$0xff] %v612
      %741 = vst [vmem:[%s170 + $0x1d8] sm:$0xff] %v613
      %742 = vst [vmem:[%s170 + $0x1e0] sm:$0xff] %v614
      %743 = vst [vmem:[%s170 + $0x1e8] sm:$0xff] %v615
      %744 = vst [vmem:[%s170 + $0x1f0] sm:$0xff] %v616
      %745 = vst [vmem:[%s170 + $0x1f8] sm:$0xff] %v617
      %746 = vst [vmem:[%s170 + $0x200] sm:$0xff] %v618
      %747 = vst [vmem:[%s170 + $0x208] sm:$0xff] %v619
      %748 = vst [vmem:[%s170 + $0x210] sm:$0xff] %v620
      %749 = vst [vmem:[%s170 + $0x218] sm:$0xff] %v621
      %750 = vst [vmem:[%s170 + $0x220] sm:$0xff] %v622
      %751 = vst [vmem:[%s170 + $0x228] sm:$0xff] %v623
      %752 = vst [vmem:[%s170 + $0x230] sm:$0xff] %v624
      %753 = vst [vmem:[%s170 + $0x238] sm:$0xff] %v625
      %754 = vst [vmem:[%s170 + $0x240] sm:$0xff] %v626
      %755 = vst [vmem:[%s170 + $0x248] sm:$0xff] %v627
      %756 = vst [vmem:[%s170 + $0x250] sm:$0xff] %v628
      %757 = vst [vmem:[%s170 + $0x258] sm:$0xff] %v629
      %758 = vst [vmem:[%s170 + $0x260] sm:$0xff] %v630
      %759 = vst [vmem:[%s170 + $0x268] sm:$0xff] %v631
      %760 = vst [vmem:[%s170 + $0x270] sm:$0xff] %v632
      %761 = vst [vmem:[%s170 + $0x278] sm:$0xff] %v633
      %762 = vst [vmem:[%s170 + $0x280] sm:$0xff] %v634
      %763 = vst [vmem:[%s170 + $0x288] sm:$0xff] %v635
      %764 = vst [vmem:[%s170 + $0x290] sm:$0xff] %v636
      %765 = vst [vmem:[%s170 + $0x298] sm:$0xff] %v637
      %766 = vst [vmem:[%s170 + $0x2a0] sm:$0xff] %v638
      %767 = vst [vmem:[%s170 + $0x2a8] sm:$0xff] %v639
      %768 = vst [vmem:[%s170 + $0x2b0] sm:$0xff] %v640
      %769 = vst [vmem:[%s170 + $0x2b8] sm:$0xff] %v641
      %770 = vst [vmem:[%s170 + $0x2c0] sm:$0xff] %v642
      %771 = vst [vmem:[%s170 + $0x2c8] sm:$0xff] %v643
      %772 = vst [vmem:[%s170 + $0x2d0] sm:$0xff] %v644
      %773 = vst [vmem:[%s170 + $0x2d8] sm:$0xff] %v645
      %774 = vst [vmem:[%s170 + $0x2e0] sm:$0xff] %v646
      %775 = vst [vmem:[%s170 + $0x2e8] sm:$0xff] %v647
      %776 = vst [vmem:[%s170 + $0x2f0] sm:$0xff] %v648
      %777 = vst [vmem:[%s170 + $0x2f8] sm:$0xff] %v649
      %778 = vst [vmem:[%s170 + $0x300] sm:$0xff] %v650
      %779 = vst [vmem:[%s170 + $0x308] sm:$0xff] %v651
      %780 = vst [vmem:[%s170 + $0x310] sm:$0xff] %v652
      %781 = vst [vmem:[%s170 + $0x318] sm:$0xff] %v653
      %782 = vst [vmem:[%s170 + $0x320] sm:$0xff] %v654
      %783 = vst [vmem:[%s170 + $0x328] sm:$0xff] %v655
      %784 = vst [vmem:[%s170 + $0x330] sm:$0xff] %v656
      %785 = vst [vmem:[%s170 + $0x338] sm:$0xff] %v657
      %786 = vst [vmem:[%s170 + $0x340] sm:$0xff] %v658
      %787 = vst [vmem:[%s170 + $0x348] sm:$0xff] %v659
      %788 = vst [vmem:[%s170 + $0x350] sm:$0xff] %v660
      %789 = vst [vmem:[%s170 + $0x358] sm:$0xff] %v661
      %790 = vst [vmem:[%s170 + $0x360] sm:$0xff] %v662
      %791 = vst [vmem:[%s170 + $0x368] sm:$0xff] %v663
      %792 = vst [vmem:[%s170 + $0x370] sm:$0xff] %v664
      %793 = vst [vmem:[%s170 + $0x378] sm:$0xff] %v665
      %794 = vst [vmem:[%s170 + $0x380] sm:$0xff] %v666
      %795 = vst [vmem:[%s170 + $0x388] sm:$0xff] %v667
      %796 = vst [vmem:[%s170 + $0x390] sm:$0xff] %v668
      %797 = vst [vmem:[%s170 + $0x398] sm:$0xff] %v669
      %798 = vst [vmem:[%s170 + $0x3a0] sm:$0xff] %v670
      %799 = vst [vmem:[%s170 + $0x3a8] sm:$0xff] %v671
      %800 = vst [vmem:[%s170 + $0x3b0] sm:$0xff] %v672
      %801 = vst [vmem:[%s170 + $0x3b8] sm:$0xff] %v673
      %802 = vst [vmem:[%s170 + $0x3c0] sm:$0xff] %v674
      %803 = vst [vmem:[%s170 + $0x3c8] sm:$0xff] %v675
      %804 = vst [vmem:[%s170 + $0x3d0] sm:$0xff] %v676
      %805 = vst [vmem:[%s170 + $0x3d8] sm:$0xff] %v677
      %806 = vst [vmem:[%s170 + $0x3e0] sm:$0xff] %v678
      %807 = vst [vmem:[%s170 + $0x3e8] sm:$0xff] %v679
      %808 = vst [vmem:[%s170 + $0x3f0] sm:$0xff] %v680
      %809 = vst [vmem:[%s170 + $0x3f8] sm:$0xff] %v681
      %p810 = scmp.lt.s32.totalorder %s14, 1
      %s811 = scalar_select %p810, %s14, 1
      %s812 = smul.addr %s811, 128
      %s813 = smul.addr %s812, 8
      %s814 = scalar_lea.vmem %s3, %s813
      // Predicated region
      $region33: #{squeeze_excitation_pallas.1} parent=31 // pred_check
        %p815 = pneg %p100
      $region34: #{squeeze_excitation_pallas.1} parent=31 // pred_check_branch
        %817 = sbr.rel (%p815) target = $region36
      $region35: #{squeeze_excitation_pallas.1} parent=31 // pred_region
        _
      $region36: #{squeeze_excitation_pallas.1} parent=31 // pred_fallthru
        _
    $region32: #{squeeze_excitation_pallas.1} parent=5 // pred_fallthru
      _
    %p818 = scmp.le.s32.totalorder 2, %s9
    // Predicated region
    $region37: #{squeeze_excitation_pallas.1} parent=5 // pred_check
      %p819 = pneg %p818
    $region38: #{squeeze_excitation_pallas.1} parent=5 // pred_check_branch
      %821 = sbr.rel (%p819) target = $region40
    $region39: #{squeeze_excitation_pallas.1} parent=5 // pred_region
      %s822 = ssub.s32 %s9, 2
      // Predicated region
      $region41: #{squeeze_excitation_pallas.1} parent=39 // pred_check
        %p823 = pneg %p106
      $region42: #{squeeze_excitation_pallas.1} parent=39 // pred_check_branch
        %825 = sbr.rel (%p823) target = $region44
      $region43: #{squeeze_excitation_pallas.1} parent=39 // pred_region
        %p826 = scmp.lt.s32.totalorder %s15, 1
        %s827 = scalar_select %p826, %s15, 1
        %s828 = smul.addr %s827, 128
        %s829 = smul.addr %s828, 8
        %s830 = scalar_lea.vmem %s3, %s829
      $region44: #{squeeze_excitation_pallas.1} parent=39 // pred_fallthru
        _
    $region40: #{squeeze_excitation_pallas.1} parent=5 // pred_fallthru
      _
  $region6: #{squeeze_excitation_pallas.1} parent=0 // loop_footer
    %s13 = sadd.s32 1, %s9
  $region7: #{squeeze_excitation_pallas.1} parent=0 // loop_footer_branch
    %8 = sbr.rel target = $region3
  $region8: #{squeeze_excitation_pallas.1} parent=0 // loop_exit
    _

</llo_original>
